<compile_context>
chip_gen: v6e
topology: v6e:2x2x1
jax: 0.10.0
libtpu: 0.0.40
codegen_flags: <defaults>
</compile_context>

<pallas_src>
import jax
import jax.numpy as jnp
from jax.experimental import pallas as pl
from jax.experimental.pallas import tpu as pltpu


LANE = 128  # TPU vreg lane width


def _round_up(n, m):
    return ((n + m - 1) // m) * m


def _cdiv(a, b):
    return -(-a // b)


# ----------------------------------------------------------------------------
# Kernel
# ----------------------------------------------------------------------------
def _disc_kernel(x_ref, w1_ref, b1_ref, w2_ref, b2_ref, w3_ref, b3_ref, o_ref):
    x = x_ref[...]                                                   # (TB, D), D unpadded

    # layer 1: Linear(D -> Hp) + LeakyReLU(0.1)
    h = jnp.dot(x, w1_ref[...], preferred_element_type=jnp.float32)  # (TB, Hp)
    h = h + b1_ref[...]                                              # (1, Hp) row bias
    h = jnp.maximum(h, 0.1 * h)                                      # single vmax

    # layer 2: Linear(Hp -> Hp) + LeakyReLU(0.1)
    h = jnp.dot(h, w2_ref[...], preferred_element_type=jnp.float32)  # (TB, Hp)
    h = h + b2_ref[...]
    h = jnp.maximum(h, 0.1 * h)

    # layer 3: Linear(Hp -> 1) with the batch along lanes:
    #   (1, Hp) . (TB, Hp)^T -> (1, TB)   (contract last dims, no explicit .T)
    z = jax.lax.dot_general(
        w3_ref[...], h, (((1,), (1,)), ((), ())),
        preferred_element_type=jnp.float32)                          # (1, TB)
    z = z + b3_ref[0, 0]                                             # SMEM scalar bias

    # sigmoid via tanh: EUP slot, no divide, exact in f32
    sig = 0.5 * (jnp.tanh(0.5 * z) + 1.0)                            # (1, TB)

    # lane-dense store: one value per sample, packed along lanes
    o_ref[...] = sig.reshape(o_ref.shape).astype(o_ref.dtype)        # (1, 1, TB)


# ----------------------------------------------------------------------------
# Wrapper
# ----------------------------------------------------------------------------
def discriminator_forward(x, kparams, *, tb_max=2048):
    """x: (B, D) float32. kparams: lane-padded params from prepare_params()."""
    B, D = x.shape
    Dw, Hp = kparams["w1"].shape
    assert D == Dw, (D, Dw)

    # batch tile: multiple of 128 (lane-major output packing); aim for >= 2
    # grid steps when B > 128 so both v7x TensorCores get work.
    if B > LANE:
        TB = min(tb_max, _round_up(_cdiv(B, 2), LANE))
    else:
        TB = LANE
    TB = max(TB, LANE)
    G = _cdiv(B, TB)
    Bp = G * TB

    # Pad only the batch dim, and only when needed (no feature-dim padding,
    # no extra HBM round trip for aligned batches).
    xp = x if Bp == B else jnp.pad(x, ((0, Bp - B), (0, 0)))

    const2 = lambda i: (0, 0)               # weights/biases stay VMEM-resident

    out = pl.pallas_call(
        _disc_kernel,
        out_shape=jax.ShapeDtypeStruct((G, 1, TB), jnp.float32),
        grid_spec=pltpu.PrefetchScalarGridSpec(
            num_scalar_prefetch=0,
            grid=(G,),
            in_specs=[
                pl.BlockSpec((TB, D), lambda i: (i, 0)),     # x tile (pipelined)
                pl.BlockSpec((D, Hp), const2),               # w1  (D unpadded)
                pl.BlockSpec((1, Hp), const2),               # b1
                pl.BlockSpec((Hp, Hp), const2),              # w2
                pl.BlockSpec((1, Hp), const2),               # b2
                pl.BlockSpec((1, Hp), const2),               # w3 (row)
                pl.BlockSpec(memory_space=pltpu.MemorySpace.SMEM),  # b3 scalar
            ],
            out_specs=pl.BlockSpec((1, 1, TB), lambda i: (i, 0, 0)),
        ),
        compiler_params=pltpu.CompilerParams(
            dimension_semantics=("parallel",),               # shard batch across TCs (v7x)
            vmem_limit_bytes=32 * 1024 * 1024,               # <= 48 MiB: safe on v7x
        ),
        cost_estimate=pl.CostEstimate(
            flops=2 * Bp * (D * Hp + Hp * Hp + Hp),
            transcendentals=Bp,
            bytes_accessed=4 * (Bp * D + D * Hp + Hp * Hp + 3 * Hp + 1 + Bp),
        ),
    )(xp, kparams["w1"], kparams["b1"], kparams["w2"], kparams["b2"],
      kparams["w3"], kparams["b3"])

    return out.reshape(Bp, 1)[:B]           # (g, 0, t) -> row g*TB + t, drop pad rows


# ----------------------------------------------------------------------------
# Parameter setup (JAX glue, outside the kernel)
# ----------------------------------------------------------------------------
def _spectral_normalize(w_torch_layout, key, n_power_iterations=1, eps=1e-12):
    """Mimic torch.nn.utils.spectral_norm at forward time (w is (out, in))."""
    # TODO(synk): torch persists the power-iteration u/v buffers across forward
    # calls; here u is re-initialized deterministically per parameter build.
    out_dim, in_dim = w_torch_layout.shape
    u = jax.random.normal(key, (out_dim,), dtype=jnp.float32)
    u = u / (jnp.linalg.norm(u) + eps)
    v = jnp.zeros((in_dim,), dtype=jnp.float32)
    for _ in range(n_power_iterations):
        v = w_torch_layout.T @ u
        v = v / (jnp.linalg.norm(v) + eps)
        u = w_torch_layout @ v
        u = u / (jnp.linalg.norm(u) + eps)
    sigma = u @ (w_torch_layout @ v)
    return w_torch_layout / sigma


def init_discriminator_params(key, num_inputs, hidden_size, use_spec_norm=True):
    """Deterministic synthetic parameter init (stand-in for helper.init_weights).

    Returns logical-shape params: weights transposed to (in, out), row biases.
    """
    ks = jax.random.split(key, 9)
    w1_t = jax.random.normal(ks[0], (hidden_size, num_inputs), jnp.float32) * 0.1
    b1 = jax.random.normal(ks[1], (hidden_size,), jnp.float32) * 0.01
    w2_t = jax.random.normal(ks[2], (hidden_size, hidden_size), jnp.float32) * 0.1
    b2 = jax.random.normal(ks[3], (hidden_size,), jnp.float32) * 0.01
    w3_t = jax.random.normal(ks[4], (1, hidden_size), jnp.float32) * 0.1
    b3 = jax.random.normal(ks[5], (1,), jnp.float32) * 0.01
    if use_spec_norm:
        w1_t = _spectral_normalize(w1_t, ks[6])
        w2_t = _spectral_normalize(w2_t, ks[7])
        # last Linear(hidden, 1) is NOT spectral-normalized in the module.
    return {
        "w1": w1_t.T,                       # (D, H)
        "b1": b1.reshape(1, hidden_size),   # (1, H)
        "w2": w2_t.T,                       # (H, H)
        "b2": b2.reshape(1, hidden_size),   # (1, H)
        "w3": w3_t.T,                       # (H, 1)
        "b3": b3.reshape(1, 1),             # (1, 1)
    }


def prepare_params(params):
    """Pad only the HIDDEN dim up to a multiple of 128 lanes (exact for this MLP:
    padded hidden units stay 0 through LeakyReLU). The input dim D is left
    unpadded so x streams through HBM without zero filler."""
    w1, b1, w2, b2, w3, b3 = (params[k] for k in ("w1", "b1", "w2", "b2", "w3", "b3"))
    D, H = w1.shape
    Hp = _round_up(H, LANE)
    return {
        "w1": jnp.pad(w1, ((0, 0), (0, Hp - H))),                 # (D, Hp)
        "b1": jnp.pad(b1, ((0, 0), (0, Hp - H))),                 # (1, Hp)
        "w2": jnp.pad(w2, ((0, Hp - H), (0, Hp - H))),            # (Hp, Hp)
        "b2": jnp.pad(b2, ((0, 0), (0, Hp - H))),                 # (1, Hp)
        "w3": jnp.pad(w3.reshape(1, H), ((0, 0), (0, Hp - H))),   # (1, Hp) row
        "b3": b3.astype(jnp.float32),                             # (1, 1) -> SMEM
    }


def _reference_forward(x, params):
    """Pure-JAX reference (logical shapes) for correctness checking."""
    h = x @ params["w1"] + params["b1"]
    h = jnp.where(h > 0, h, 0.1 * h)
    h = h @ params["w2"] + params["b2"]
    h = jnp.where(h > 0, h, 0.1 * h)
    z = h @ params["w3"] + params["b3"]
    return jax.nn.sigmoid(z)


if __name__ == "__main__":
    D, H = 32, 32  # num_inputs (state+action concat), hidden_size

    key = jax.random.PRNGKey(0)
    k_params, k_x1, k_x2 = jax.random.split(key, 3)
    params = init_discriminator_params(k_params, D, H, use_spec_norm=True)
    kparams = prepare_params(params)

    # small batch, single tile
    x1 = jax.random.normal(k_x1, (8, D), dtype=jnp.float32)
    prob1 = jax.block_until_ready(discriminator_forward(x1, kparams))
    ref1 = _reference_forward(x1, params)
    assert prob1.shape == (8, 1)
    assert jnp.allclose(prob1, ref1, atol=1e-4, rtol=1e-4)

    # ragged batch exercising the multi-tile grid + minimal batch padding path
    x2 = jax.random.normal(k_x2, (300, D), dtype=jnp.float32)
    prob2 = jax.block_until_ready(discriminator_forward(x2, kparams))
    ref2 = _reference_forward(x2, params)
    assert prob2.shape == (300, 1)
    assert jnp.allclose(prob2, ref2, atol=1e-4, rtol=1e-4)

    print("KERNEL_OK")
</pallas_src>

<mosaic_0001>
module attributes {stable_mosaic.version = 11 : i64} {
  func.func @_disc_kernel(%arg0: i32, %arg1: memref<128x32xf32, #tpu.memory_space<vmem>>, %arg2: memref<32x128xf32, #tpu.memory_space<vmem>>, %arg3: memref<1x128xf32, #tpu.memory_space<vmem>>, %arg4: memref<128x128xf32, #tpu.memory_space<vmem>>, %arg5: memref<1x128xf32, #tpu.memory_space<vmem>>, %arg6: memref<1x128xf32, #tpu.memory_space<vmem>>, %arg7: memref<1x1xf32, #tpu.memory_space<smem>>, %arg8: memref<1x1x128xf32, #tpu.memory_space<vmem>>) attributes {dimension_semantics = [#tpu.dimension_semantics<parallel>], iteration_bounds = array<i64: 1>, scalar_prefetch = 0 : i64, scratch_operands = 0 : i64, tpu.core_type = #tpu.core_type<tc>, window_params = [{transform_indices = @transform_0, window_bounds = array<i64: 128, 32>}, {pipeline_mode = #tpu.pipeline_mode<synchronous>, transform_indices = @transform_1, window_bounds = array<i64: 32, 128>}, {pipeline_mode = #tpu.pipeline_mode<synchronous>, transform_indices = @transform_2, window_bounds = array<i64: 1, 128>}, {pipeline_mode = #tpu.pipeline_mode<synchronous>, transform_indices = @transform_3, window_bounds = array<i64: 128, 128>}, {pipeline_mode = #tpu.pipeline_mode<synchronous>, transform_indices = @transform_4, window_bounds = array<i64: 1, 128>}, {pipeline_mode = #tpu.pipeline_mode<synchronous>, transform_indices = @transform_5, window_bounds = array<i64: 1, 128>}, {transform_indices = @transform_6, window_bounds = array<i64: 1, 1>}, {transform_indices = @transform_7, window_bounds = array<i64: 1, 1, 128>}]} {
    %c0 = arith.constant 0 : index
    %c0_0 = arith.constant 0 : index
    %0 = vector.load %arg1[%c0, %c0_0] : memref<128x32xf32, #tpu.memory_space<vmem>>, vector<128x32xf32>
    %c0_1 = arith.constant 0 : index
    %c0_2 = arith.constant 0 : index
    %1 = vector.load %arg2[%c0_1, %c0_2] : memref<32x128xf32, #tpu.memory_space<vmem>>, vector<32x128xf32>
    %cst = arith.constant dense<0.000000e+00> : vector<128x128xf32>
    %2 = tpu.matmul %0, %1, %cst {dimension_numbers = #tpu.dot_dimension_numbers<[1], [0], [0], [1], [0, 0, 1, 1], [], []>} : vector<128x32xf32>, vector<32x128xf32>, vector<128x128xf32> -> vector<128x128xf32>
    %c0_3 = arith.constant 0 : index
    %c0_4 = arith.constant 0 : index
    %3 = vector.load %arg3[%c0_3, %c0_4] : memref<1x128xf32, #tpu.memory_space<vmem>>, vector<1x128xf32>
    %4 = vector.broadcast %3 : vector<1x128xf32> to vector<128x128xf32>
    %5 = arith.addf %2, %4 : vector<128x128xf32>
    %cst_5 = arith.constant 1.000000e-01 : f32
    %6 = vector.broadcast %cst_5 : f32 to vector<128x128xf32>
    %7 = arith.mulf %6, %5 : vector<128x128xf32>
    %8 = arith.maximumf %5, %7 : vector<128x128xf32>
    %c0_6 = arith.constant 0 : index
    %c0_7 = arith.constant 0 : index
    %9 = vector.load %arg4[%c0_6, %c0_7] : memref<128x128xf32, #tpu.memory_space<vmem>>, vector<128x128xf32>
    %cst_8 = arith.constant dense<0.000000e+00> : vector<128x128xf32>
    %10 = tpu.matmul %8, %9, %cst_8 {dimension_numbers = #tpu.dot_dimension_numbers<[1], [0], [0], [1], [0, 0, 1, 1], [], []>} : vector<128x128xf32>, vector<128x128xf32>, vector<128x128xf32> -> vector<128x128xf32>
    %c0_9 = arith.constant 0 : index
    %c0_10 = arith.constant 0 : index
    %11 = vector.load %arg5[%c0_9, %c0_10] : memref<1x128xf32, #tpu.memory_space<vmem>>, vector<1x128xf32>
    %12 = vector.broadcast %11 : vector<1x128xf32> to vector<128x128xf32>
    %13 = arith.addf %10, %12 : vector<128x128xf32>
    %cst_11 = arith.constant 1.000000e-01 : f32
    %14 = vector.broadcast %cst_11 : f32 to vector<128x128xf32>
    %15 = arith.mulf %14, %13 : vector<128x128xf32>
    %16 = arith.maximumf %13, %15 : vector<128x128xf32>
    %c0_12 = arith.constant 0 : index
    %c0_13 = arith.constant 0 : index
    %17 = vector.load %arg6[%c0_12, %c0_13] : memref<1x128xf32, #tpu.memory_space<vmem>>, vector<1x128xf32>
    %cst_14 = arith.constant dense<0.000000e+00> : vector<1x128xf32>
    %18 = tpu.matmul %17, %16, %cst_14 {dimension_numbers = #tpu.dot_dimension_numbers<[1], [1], [0], [0], [0, 0, 1, 0], [], []>} : vector<1x128xf32>, vector<128x128xf32>, vector<1x128xf32> -> vector<1x128xf32>
    %c0_15 = arith.constant 0 : index
    %c0_16 = arith.constant 0 : index
    %19 = memref.load %arg7[%c0_15, %c0_16] : memref<1x1xf32, #tpu.memory_space<smem>>
    %20 = vector.broadcast %19 : f32 to vector<1x128xf32>
    %21 = arith.addf %18, %20 : vector<1x128xf32>
    %cst_17 = arith.constant 5.000000e-01 : f32
    %22 = vector.broadcast %cst_17 : f32 to vector<1x128xf32>
    %23 = arith.mulf %22, %21 : vector<1x128xf32>
    %24 = math.tanh %23 : vector<1x128xf32>
    %cst_18 = arith.constant 1.000000e+00 : f32
    %25 = vector.broadcast %cst_18 : f32 to vector<1x128xf32>
    %26 = arith.addf %24, %25 : vector<1x128xf32>
    %cst_19 = arith.constant 5.000000e-01 : f32
    %27 = vector.broadcast %cst_19 : f32 to vector<1x128xf32>
    %28 = arith.mulf %27, %26 : vector<1x128xf32>
    %29 = vector.shape_cast %28 : vector<1x128xf32> to vector<1x1x128xf32>
    %c0_20 = arith.constant 0 : index
    %c0_21 = arith.constant 0 : index
    %c0_22 = arith.constant 0 : index
    %30 = vector.load %arg8[%c0_20, %c0_21, %c0_22] : memref<1x1x128xf32, #tpu.memory_space<vmem>>, vector<1x1x128xf32>
    tpu.vector_store %arg8[%c0_20, %c0_21, %c0_22], %29 {strides = array<i32>} : memref<1x1x128xf32, #tpu.memory_space<vmem>>, vector<1x1x128xf32>,
    return
  }
  func.func @transform_0(%arg0: i32) -> (i32, i32) {
    %c0_i32 = arith.constant 0 : i32
    %c0_i32_0 = arith.constant 0 : i32
    return %arg0, %c0_i32 : i32, i32
  }
  func.func @transform_1(%arg0: i32) -> (i32, i32) {
    %c0_i32 = arith.constant 0 : i32
    %c0_i32_0 = arith.constant 0 : i32
    %c0_i32_1 = arith.constant 0 : i32
    return %c0_i32, %c0_i32_0 : i32, i32
  }
  func.func @transform_2(%arg0: i32) -> (i32, i32) {
    %c0_i32 = arith.constant 0 : i32
    %c0_i32_0 = arith.constant 0 : i32
    %c0_i32_1 = arith.constant 0 : i32
    return %c0_i32, %c0_i32_0 : i32, i32
  }
  func.func @transform_3(%arg0: i32) -> (i32, i32) {
    %c0_i32 = arith.constant 0 : i32
    %c0_i32_0 = arith.constant 0 : i32
    %c0_i32_1 = arith.constant 0 : i32
    return %c0_i32, %c0_i32_0 : i32, i32
  }
  func.func @transform_4(%arg0: i32) -> (i32, i32) {
    %c0_i32 = arith.constant 0 : i32
    %c0_i32_0 = arith.constant 0 : i32
    %c0_i32_1 = arith.constant 0 : i32
    return %c0_i32, %c0_i32_0 : i32, i32
  }
  func.func @transform_5(%arg0: i32) -> (i32, i32) {
    %c0_i32 = arith.constant 0 : i32
    %c0_i32_0 = arith.constant 0 : i32
    %c0_i32_1 = arith.constant 0 : i32
    return %c0_i32, %c0_i32_0 : i32, i32
  }
  func.func @transform_6(%arg0: i32) -> (i32, i32) {
    %c0_i32 = arith.constant 0 : i32
    %c0_i32_0 = arith.constant 0 : i32
    %c0_i32_1 = arith.constant 0 : i32
    return %c0_i32, %c0_i32_0 : i32, i32
  }
  func.func @transform_7(%arg0: i32) -> (i32, i32, i32) {
    %c0_i32 = arith.constant 0 : i32
    %c0_i32_0 = arith.constant 0 : i32
    %c0_i32_1 = arith.constant 0 : i32
    return %arg0, %c0_i32, %c0_i32_0 : i32, i32, i32
  }
}

</mosaic_0001>

<llo_original>
// kernel: tpu_custom_call.1
$region0: #{tpu_custom_call.1}
  #allocation0 [shape = 'u32[]', space=smem, size = 0x4, offset = 0x4, fixed_abs, tag = 'smem constant byte address 0x4 - core index']
  #allocation1 [shape = 'u32[144,128]{1,0:T(1,128)}', space=vmem, size = 0x12000, scoped, tag = 'internal scratch']
  #allocation2 [shape = 'f32[1,1]{1,0:T(1,128)S(6)}', space=smem, size = 0x200, scoped, tag = 'scoped memory for tpu_custom_call.1']
  %s0 = inlined_call_operand.vmem [shape: f32[128,32], index: 0, kind: input, shape index: {}]
  %s1 = inlined_call_operand.vmem [shape: f32[32,128], index: 1, kind: input, shape index: {}]
  %s2 = inlined_call_operand.vmem [shape: f32[1,128], index: 2, kind: input, shape index: {}]
  %s3 = inlined_call_operand.vmem [shape: f32[128,128], index: 3, kind: input, shape index: {}]
  %s4 = inlined_call_operand.vmem [shape: f32[1,128], index: 4, kind: input, shape index: {}]
  %s5 = inlined_call_operand.vmem [shape: f32[1,128], index: 5, kind: input, shape index: {}]
  %s6 = inlined_call_operand.<no memory space> [shape: f32[1,1], index: 6, kind: input, shape index: {}]
  %s7 = inlined_call_operand.hbm [shape: f32[1,1,128], index: 7, kind: output, shape index: {}]
  %s8 = sld [smem:[#allocation0]]
  $region38: #{tpu_custom_call.1} parent=0
    _
  %s10 = ssub.s32 1, %s8
  %s11 = scalar_select 0, %s10, %s8
  %12 = sst [smem:[#allocation2]] %s6
  $region1: #{tpu_custom_call.1} parent=0
    #allocation3 [shape = 'u8[512]{0}', space=vmem, size = 0x400, scoped, tag = 'output window, operand 0, single buffered']
    #allocation4 [shape = 's32[1]{0}', space=sflag, size = 0x4, scoped, tag = 'scoped memory for tpu_custom_call.1']
    %13 = vsyncpa [#allocation4], 0
    // Predicated region
    $region2: #{tpu_custom_call.1} parent=1 // pred_check
      _
    $region3: #{tpu_custom_call.1} parent=1 // pred_check_branch
      %15 = sbr.rel (0) target = $region5
    $region4: #{tpu_custom_call.1} parent=1 // pred_region
      _
    $region5: #{tpu_custom_call.1} parent=1 // pred_fallthru
      _
    // Predicated region
    $region6: #{tpu_custom_call.1} parent=1 // pred_check
      _
    $region7: #{tpu_custom_call.1} parent=1 // pred_check_branch
      %17 = sbr.rel (0) target = $region9
    $region8: #{tpu_custom_call.1} parent=1 // pred_region
      _
    $region9: #{tpu_custom_call.1} parent=1 // pred_fallthru
      _
    // Predicated region
    $region10: #{tpu_custom_call.1} parent=1 // pred_check
      _
    $region11: #{tpu_custom_call.1} parent=1 // pred_check_branch
      %19 = sbr.rel (0) target = $region13
    $region12: #{tpu_custom_call.1} parent=1 // pred_region
      _
    $region13: #{tpu_custom_call.1} parent=1 // pred_fallthru
      _
    // Predicated region
    $region14: #{tpu_custom_call.1} parent=1 // pred_check
      _
    $region15: #{tpu_custom_call.1} parent=1 // pred_check_branch
      %21 = sbr.rel (0) target = $region17
    $region16: #{tpu_custom_call.1} parent=1 // pred_region
      _
    $region17: #{tpu_custom_call.1} parent=1 // pred_fallthru
      _
    // Predicated region
    $region18: #{tpu_custom_call.1} parent=1 // pred_check
      _
    $region19: #{tpu_custom_call.1} parent=1 // pred_check_branch
      %23 = sbr.rel (0) target = $region21
    $region20: #{tpu_custom_call.1} parent=1 // pred_region
      _
    $region21: #{tpu_custom_call.1} parent=1 // pred_fallthru
      _
    // Predicated region
    $region22: #{tpu_custom_call.1} parent=1 // pred_check
      _
    $region23: #{tpu_custom_call.1} parent=1 // pred_check_branch
      %25 = sbr.rel (0) target = $region25
    $region24: #{tpu_custom_call.1} parent=1 // pred_region
      _
    $region25: #{tpu_custom_call.1} parent=1 // pred_fallthru
      _
    // Predicated region
    $region26: #{tpu_custom_call.1} parent=1 // pred_check
      _
    $region27: #{tpu_custom_call.1} parent=1 // pred_check_branch
      %27 = sbr.rel (0) target = $region29
    $region28: #{tpu_custom_call.1} parent=1 // pred_region
      _
    $region29: #{tpu_custom_call.1} parent=1 // pred_fallthru
      _
    %v28 = vld [vmem:[%s0] sm:$0xff]
    %v29 = vld [vmem:[%s0 + $0x8] sm:$0xff]
    %v30 = vld [vmem:[%s0 + $0x10] sm:$0xff]
    %v31 = vld [vmem:[%s0 + $0x18] sm:$0xff]
    %v32 = vld [vmem:[%s0 + $0x20] sm:$0xff]
    %v33 = vld [vmem:[%s0 + $0x28] sm:$0xff]
    %v34 = vld [vmem:[%s0 + $0x30] sm:$0xff]
    %v35 = vld [vmem:[%s0 + $0x38] sm:$0xff]
    %v36 = vld [vmem:[%s0 + $0x40] sm:$0xff]
    %v37 = vld [vmem:[%s0 + $0x48] sm:$0xff]
    %v38 = vld [vmem:[%s0 + $0x50] sm:$0xff]
    %v39 = vld [vmem:[%s0 + $0x58] sm:$0xff]
    %v40 = vld [vmem:[%s0 + $0x60] sm:$0xff]
    %v41 = vld [vmem:[%s0 + $0x68] sm:$0xff]
    %v42 = vld [vmem:[%s0 + $0x70] sm:$0xff]
    %v43 = vld [vmem:[%s0 + $0x78] sm:$0xff]
    %v44 = vld [vmem:[%s1] sm:$0xff]
    %v45 = vld [vmem:[%s1 + $0x8] sm:$0xff]
    %v46 = vld [vmem:[%s1 + $0x10] sm:$0xff]
    %v47 = vld [vmem:[%s1 + $0x18] sm:$0xff]
    %v48 = vld [vmem:[%s2] sm:$0x1]
    %v50 = vlaneseq
    %v51 = vshrl.u32 %v50, 7
    %v52 = vsub.s32 0, %v51
    %v53 = vrot.slane %v48, %v52
    %vm55 = vcmask 261120
    %v57 = vsel %vm55, %v28, 0
    %v60 = vsel %vm55, %v29, 0
    %v63 = vsel %vm55, %v30, 0
    %v66 = vsel %vm55, %v31, 0
    %v69 = vsel %vm55, %v32, 0
    %v72 = vsel %vm55, %v33, 0
    %v75 = vsel %vm55, %v34, 0
    %v78 = vsel %vm55, %v35, 0
    %v81 = vsel %vm55, %v36, 0
    %v84 = vsel %vm55, %v37, 0
    %v87 = vsel %vm55, %v38, 0
    %v90 = vsel %vm55, %v39, 0
    %v93 = vsel %vm55, %v40, 0
    %v96 = vsel %vm55, %v41, 0
    %v99 = vsel %vm55, %v42, 0
    %v102 = vsel %vm55, %v43, 0
    %104 = vmatprep.subr.mxu0 0.0
    %105 = vmatpush1.msra.mxu0 0.0
    %106 = vmatprep.subr.mxu0 0.0
    %107 = vmatpush1.msra.mxu0 0.0
    %108 = vmatprep.subr.mxu0 0.0
    %109 = vmatpush1.msra.mxu0 0.0
    %110 = vmatprep.subr.mxu0 0.0
    %111 = vmatpush1.msra.mxu0 0.0
    %112 = vmatprep.subr.mxu0 0.0
    %113 = vmatpush1.msra.mxu0 0.0
    %114 = vmatprep.subr.mxu0 0.0
    %115 = vmatpush1.msra.mxu0 0.0
    %116 = vmatprep.subr.mxu0 0.0
    %117 = vmatpush1.msra.mxu0 0.0
    %118 = vmatprep.subr.mxu0 0.0
    %119 = vmatpush1.msra.mxu0 0.0
    %120 = vmatprep.subr.mxu0 0.0
    %121 = vmatpush1.msra.mxu0 0.0
    %122 = vmatprep.subr.mxu0 0.0
    %123 = vmatpush1.msra.mxu0 0.0
    %124 = vmatprep.subr.mxu0 0.0
    %125 = vmatpush1.msra.mxu0 0.0
    %126 = vmatprep.subr.mxu0 0.0
    %127 = vmatpush1.msra.mxu0 0.0
    %128 = vmatprep.subr.mxu0 0.0
    %129 = vmatpush1.msra.mxu0 %v47
    %130 = vmatprep.subr.mxu0 0.0
    %131 = vmatpush1.msra.mxu0 %v46
    %132 = vmatprep.subr.mxu0 0.0
    %133 = vmatpush1.msra.mxu0 %v45
    %134 = vmatprep.subr.mxu0 0.0
    %135 = vmatpush1.msra.mxu0 %v44
    %136 = vmatprep.subr.mxu0 0.0
    %137 = vmatpush2.msra.mxu0 0.0
    %138 = vmatprep.subr.mxu0 0.0
    %139 = vmatpush2.msra.mxu0 0.0
    %140 = vmatprep.subr.mxu0 0.0
    %141 = vmatpush2.msra.mxu0 0.0
    %142 = vmatprep.subr.mxu0 0.0
    %143 = vmatpush2.msra.mxu0 0.0
    %144 = vmatprep.subr.mxu0 0.0
    %145 = vmatpush2.msra.mxu0 0.0
    %146 = vmatprep.subr.mxu0 0.0
    %147 = vmatpush2.msra.mxu0 0.0
    %148 = vmatprep.subr.mxu0 0.0
    %149 = vmatpush2.msra.mxu0 0.0
    %150 = vmatprep.subr.mxu0 0.0
    %151 = vmatpush2.msra.mxu0 0.0
    %152 = vmatprep.subr.mxu0 0.0
    %153 = vmatpush2.msra.mxu0 0.0
    %154 = vmatprep.subr.mxu0 0.0
    %155 = vmatpush2.msra.mxu0 0.0
    %156 = vmatprep.subr.mxu0 0.0
    %157 = vmatpush2.msra.mxu0 0.0
    %158 = vmatprep.subr.mxu0 0.0
    %159 = vmatpush2.msra.mxu0 0.0
    %160 = vmatprep.subr.mxu0 0.0
    %161 = vmatpush2.msra.mxu0 0.0
    %162 = vmatprep.subr.mxu0 0.0
    %163 = vmatpush2.msra.mxu0 0.0
    %164 = vmatprep.subr.mxu0 0.0
    %165 = vmatpush2.msra.mxu0 0.0
    %166 = vmatprep.subr.mxu0 0.0
    %167 = vmatpush2.msra.mxu0 0.0
    %168 = vmatprep.mubr.f32.mxu0 0.0
    %169 = vmatmul.mubr.f32.gmra.mxu0 %v57
    %v170 = vpop.f32.mrf.mxu0
    %v171 = vadd.f32 %v53, %v170
    %v172 = vpop.f32.mrf.mxu0
    %173 = vmatprep.mubr.f32.mxu0 0.0
    %174 = vmatmul.mubr.f32.gmra.mxu0 %v60
    %v175 = vpop.f32.mrf.mxu0
    %v176 = vadd.f32 %v53, %v175
    %v177 = vpop.f32.mrf.mxu0
    %178 = vmatprep.mubr.f32.mxu0 0.0
    %179 = vmatmul.mubr.f32.gmra.mxu0 %v63
    %v180 = vpop.f32.mrf.mxu0
    %v181 = vadd.f32 %v53, %v180
    %v182 = vpop.f32.mrf.mxu0
    %183 = vmatprep.mubr.f32.mxu0 0.0
    %184 = vmatmul.mubr.f32.gmra.mxu0 %v66
    %v185 = vpop.f32.mrf.mxu0
    %v186 = vadd.f32 %v53, %v185
    %v187 = vpop.f32.mrf.mxu0
    %188 = vmatprep.mubr.f32.mxu0 0.0
    %189 = vmatmul.mubr.f32.gmra.mxu0 %v69
    %v190 = vpop.f32.mrf.mxu0
    %v191 = vadd.f32 %v53, %v190
    %v192 = vpop.f32.mrf.mxu0
    %193 = vmatprep.mubr.f32.mxu0 0.0
    %194 = vmatmul.mubr.f32.gmra.mxu0 %v72
    %v195 = vpop.f32.mrf.mxu0
    %v196 = vadd.f32 %v53, %v195
    %v197 = vpop.f32.mrf.mxu0
    %198 = vmatprep.mubr.f32.mxu0 0.0
    %199 = vmatmul.mubr.f32.gmra.mxu0 %v75
    %v200 = vpop.f32.mrf.mxu0
    %v201 = vadd.f32 %v53, %v200
    %v202 = vpop.f32.mrf.mxu0
    %203 = vmatprep.mubr.f32.mxu0 0.0
    %204 = vmatmul.mubr.f32.gmra.mxu0 %v78
    %v205 = vpop.f32.mrf.mxu0
    %v206 = vadd.f32 %v53, %v205
    %v207 = vpop.f32.mrf.mxu0
    %208 = vmatprep.mubr.f32.mxu0 0.0
    %209 = vmatmul.mubr.f32.gmra.mxu0 %v81
    %v210 = vpop.f32.mrf.mxu0
    %v211 = vadd.f32 %v53, %v210
    %v212 = vpop.f32.mrf.mxu0
    %213 = vmatprep.mubr.f32.mxu0 0.0
    %214 = vmatmul.mubr.f32.gmra.mxu0 %v84
    %v215 = vpop.f32.mrf.mxu0
    %v216 = vadd.f32 %v53, %v215
    %v217 = vpop.f32.mrf.mxu0
    %218 = vmatprep.mubr.f32.mxu0 0.0
    %219 = vmatmul.mubr.f32.gmra.mxu0 %v87
    %v220 = vpop.f32.mrf.mxu0
    %v221 = vadd.f32 %v53, %v220
    %v222 = vpop.f32.mrf.mxu0
    %223 = vmatprep.mubr.f32.mxu0 0.0
    %224 = vmatmul.mubr.f32.gmra.mxu0 %v90
    %v225 = vpop.f32.mrf.mxu0
    %v226 = vadd.f32 %v53, %v225
    %v227 = vpop.f32.mrf.mxu0
    %228 = vmatprep.mubr.f32.mxu0 0.0
    %229 = vmatmul.mubr.f32.gmra.mxu0 %v93
    %v230 = vpop.f32.mrf.mxu0
    %v231 = vadd.f32 %v53, %v230
    %v232 = vpop.f32.mrf.mxu0
    %233 = vmatprep.mubr.f32.mxu0 0.0
    %234 = vmatmul.mubr.f32.gmra.mxu0 %v96
    %v235 = vpop.f32.mrf.mxu0
    %v236 = vadd.f32 %v53, %v235
    %v237 = vpop.f32.mrf.mxu0
    %238 = vmatprep.mubr.f32.mxu0 0.0
    %239 = vmatmul.mubr.f32.gmra.mxu0 %v99
    %v240 = vpop.f32.mrf.mxu0
    %v241 = vadd.f32 %v53, %v240
    %v242 = vpop.f32.mrf.mxu0
    %243 = vmatprep.mubr.f32.mxu0 0.0
    %244 = vmatmul.mubr.f32.gmra.mxu0 %v102
    %v245 = vpop.f32.mrf.mxu0
    %v246 = vadd.f32 %v53, %v245
    %v247 = vpop.f32.mrf.mxu0
    %248 = vdwg.mxu0
    %v249 = vmul.f32 %v171, 0.1
    %v250 = vmul.f32 %v176, 0.1
    %v251 = vmul.f32 %v181, 0.1
    %v252 = vmul.f32 %v186, 0.1
    %v253 = vmul.f32 %v191, 0.1
    %v254 = vmul.f32 %v196, 0.1
    %v255 = vmul.f32 %v201, 0.1
    %v256 = vmul.f32 %v206, 0.1
    %v257 = vmul.f32 %v211, 0.1
    %v258 = vmul.f32 %v216, 0.1
    %v259 = vmul.f32 %v221, 0.1
    %v260 = vmul.f32 %v226, 0.1
    %v261 = vmul.f32 %v231, 0.1
    %v262 = vmul.f32 %v236, 0.1
    %v263 = vmul.f32 %v241, 0.1
    %v264 = vmul.f32 %v246, 0.1
    %v265 = vmax.f32 %v171, %v249
    %v266 = vmax.f32 %v176, %v250
    %v267 = vmax.f32 %v181, %v251
    %v268 = vmax.f32 %v186, %v252
    %v269 = vmax.f32 %v191, %v253
    %v270 = vmax.f32 %v196, %v254
    %v271 = vmax.f32 %v201, %v255
    %v272 = vmax.f32 %v206, %v256
    %v273 = vmax.f32 %v211, %v257
    %v274 = vmax.f32 %v216, %v258
    %v275 = vmax.f32 %v221, %v259
    %v276 = vmax.f32 %v226, %v260
    %v277 = vmax.f32 %v231, %v261
    %v278 = vmax.f32 %v236, %v262
    %v279 = vmax.f32 %v241, %v263
    %v280 = vmax.f32 %v246, %v264
    %v281 = vld [vmem:[%s3] sm:$0xff]
    %v282 = vld [vmem:[%s3 + $0x8] sm:$0xff]
    %v283 = vld [vmem:[%s3 + $0x10] sm:$0xff]
    %v284 = vld [vmem:[%s3 + $0x18] sm:$0xff]
    %v285 = vld [vmem:[%s3 + $0x20] sm:$0xff]
    %v286 = vld [vmem:[%s3 + $0x28] sm:$0xff]
    %v287 = vld [vmem:[%s3 + $0x30] sm:$0xff]
    %v288 = vld [vmem:[%s3 + $0x38] sm:$0xff]
    %v289 = vld [vmem:[%s3 + $0x40] sm:$0xff]
    %v290 = vld [vmem:[%s3 + $0x48] sm:$0xff]
    %v291 = vld [vmem:[%s3 + $0x50] sm:$0xff]
    %v292 = vld [vmem:[%s3 + $0x58] sm:$0xff]
    %v293 = vld [vmem:[%s3 + $0x60] sm:$0xff]
    %v294 = vld [vmem:[%s3 + $0x68] sm:$0xff]
    %v295 = vld [vmem:[%s3 + $0x70] sm:$0xff]
    %v296 = vld [vmem:[%s3 + $0x78] sm:$0xff]
    %v297 = vld [vmem:[%s4] sm:$0x1]
    %v299 = vlaneseq
    %v300 = vshrl.u32 %v299, 7
    %v301 = vsub.s32 0, %v300
    %v302 = vrot.slane %v297, %v301
    %304 = vmatprep.subr.mxu0 0.0
    %305 = vmatpush1.msra.mxu0 %v296
    %306 = vmatprep.subr.mxu0 0.0
    %307 = vmatpush1.msra.mxu0 %v295
    %308 = vmatprep.subr.mxu0 0.0
    %309 = vmatpush1.msra.mxu0 %v294
    %310 = vmatprep.subr.mxu0 0.0
    %311 = vmatpush1.msra.mxu0 %v293
    %312 = vmatprep.subr.mxu0 0.0
    %313 = vmatpush1.msra.mxu0 %v292
    %314 = vmatprep.subr.mxu0 0.0
    %315 = vmatpush1.msra.mxu0 %v291
    %316 = vmatprep.subr.mxu0 0.0
    %317 = vmatpush1.msra.mxu0 %v290
    %318 = vmatprep.subr.mxu0 0.0
    %319 = vmatpush1.msra.mxu0 %v289
    %320 = vmatprep.subr.mxu0 0.0
    %321 = vmatpush1.msra.mxu0 %v288
    %322 = vmatprep.subr.mxu0 0.0
    %323 = vmatpush1.msra.mxu0 %v287
    %324 = vmatprep.subr.mxu0 0.0
    %325 = vmatpush1.msra.mxu0 %v286
    %326 = vmatprep.subr.mxu0 0.0
    %327 = vmatpush1.msra.mxu0 %v285
    %328 = vmatprep.subr.mxu0 0.0
    %329 = vmatpush1.msra.mxu0 %v284
    %330 = vmatprep.subr.mxu0 0.0
    %331 = vmatpush1.msra.mxu0 %v283
    %332 = vmatprep.subr.mxu0 0.0
    %333 = vmatpush1.msra.mxu0 %v282
    %334 = vmatprep.subr.mxu0 0.0
    %335 = vmatpush1.msra.mxu0 %v281
    %336 = vmatprep.subr.mxu0 0.0
    %337 = vmatpush2.msra.mxu0 0.0
    %338 = vmatprep.subr.mxu0 0.0
    %339 = vmatpush2.msra.mxu0 0.0
    %340 = vmatprep.subr.mxu0 0.0
    %341 = vmatpush2.msra.mxu0 0.0
    %342 = vmatprep.subr.mxu0 0.0
    %343 = vmatpush2.msra.mxu0 0.0
    %344 = vmatprep.subr.mxu0 0.0
    %345 = vmatpush2.msra.mxu0 0.0
    %346 = vmatprep.subr.mxu0 0.0
    %347 = vmatpush2.msra.mxu0 0.0
    %348 = vmatprep.subr.mxu0 0.0
    %349 = vmatpush2.msra.mxu0 0.0
    %350 = vmatprep.subr.mxu0 0.0
    %351 = vmatpush2.msra.mxu0 0.0
    %352 = vmatprep.subr.mxu0 0.0
    %353 = vmatpush2.msra.mxu0 0.0
    %354 = vmatprep.subr.mxu0 0.0
    %355 = vmatpush2.msra.mxu0 0.0
    %356 = vmatprep.subr.mxu0 0.0
    %357 = vmatpush2.msra.mxu0 0.0
    %358 = vmatprep.subr.mxu0 0.0
    %359 = vmatpush2.msra.mxu0 0.0
    %360 = vmatprep.subr.mxu0 0.0
    %361 = vmatpush2.msra.mxu0 0.0
    %362 = vmatprep.subr.mxu0 0.0
    %363 = vmatpush2.msra.mxu0 0.0
    %364 = vmatprep.subr.mxu0 0.0
    %365 = vmatpush2.msra.mxu0 0.0
    %366 = vmatprep.subr.mxu0 0.0
    %367 = vmatpush2.msra.mxu0 0.0
    %368 = vmatprep.mubr.f32.mxu0 0.0
    %369 = vmatmul.mubr.f32.gmra.mxu0 %v265
    %v370 = vpop.f32.mrf.mxu0
    %v371 = vadd.f32 %v302, %v370
    %v372 = vpop.f32.mrf.mxu0
    %373 = vmatprep.mubr.f32.mxu0 0.0
    %374 = vmatmul.mubr.f32.gmra.mxu0 %v266
    %v375 = vpop.f32.mrf.mxu0
    %v376 = vadd.f32 %v302, %v375
    %v377 = vpop.f32.mrf.mxu0
    %378 = vmatprep.mubr.f32.mxu0 0.0
    %379 = vmatmul.mubr.f32.gmra.mxu0 %v267
    %v380 = vpop.f32.mrf.mxu0
    %v381 = vadd.f32 %v302, %v380
    %v382 = vpop.f32.mrf.mxu0
    %383 = vmatprep.mubr.f32.mxu0 0.0
    %384 = vmatmul.mubr.f32.gmra.mxu0 %v268
    %v385 = vpop.f32.mrf.mxu0
    %v386 = vadd.f32 %v302, %v385
    %v387 = vpop.f32.mrf.mxu0
    %388 = vmatprep.mubr.f32.mxu0 0.0
    %389 = vmatmul.mubr.f32.gmra.mxu0 %v269
    %v390 = vpop.f32.mrf.mxu0
    %v391 = vadd.f32 %v302, %v390
    %v392 = vpop.f32.mrf.mxu0
    %393 = vmatprep.mubr.f32.mxu0 0.0
    %394 = vmatmul.mubr.f32.gmra.mxu0 %v270
    %v395 = vpop.f32.mrf.mxu0
    %v396 = vadd.f32 %v302, %v395
    %v397 = vpop.f32.mrf.mxu0
    %398 = vmatprep.mubr.f32.mxu0 0.0
    %399 = vmatmul.mubr.f32.gmra.mxu0 %v271
    %v400 = vpop.f32.mrf.mxu0
    %v401 = vadd.f32 %v302, %v400
    %v402 = vpop.f32.mrf.mxu0
    %403 = vmatprep.mubr.f32.mxu0 0.0
    %404 = vmatmul.mubr.f32.gmra.mxu0 %v272
    %v405 = vpop.f32.mrf.mxu0
    %v406 = vadd.f32 %v302, %v405
    %v407 = vpop.f32.mrf.mxu0
    %408 = vmatprep.mubr.f32.mxu0 0.0
    %409 = vmatmul.mubr.f32.gmra.mxu0 %v273
    %v410 = vpop.f32.mrf.mxu0
    %v411 = vadd.f32 %v302, %v410
    %v412 = vpop.f32.mrf.mxu0
    %413 = vmatprep.mubr.f32.mxu0 0.0
    %414 = vmatmul.mubr.f32.gmra.mxu0 %v274
    %v415 = vpop.f32.mrf.mxu0
    %v416 = vadd.f32 %v302, %v415
    %v417 = vpop.f32.mrf.mxu0
    %418 = vmatprep.mubr.f32.mxu0 0.0
    %419 = vmatmul.mubr.f32.gmra.mxu0 %v275
    %v420 = vpop.f32.mrf.mxu0
    %v421 = vadd.f32 %v302, %v420
    %v422 = vpop.f32.mrf.mxu0
    %423 = vmatprep.mubr.f32.mxu0 0.0
    %424 = vmatmul.mubr.f32.gmra.mxu0 %v276
    %v425 = vpop.f32.mrf.mxu0
    %v426 = vadd.f32 %v302, %v425
    %v427 = vpop.f32.mrf.mxu0
    %428 = vmatprep.mubr.f32.mxu0 0.0
    %429 = vmatmul.mubr.f32.gmra.mxu0 %v277
    %v430 = vpop.f32.mrf.mxu0
    %v431 = vadd.f32 %v302, %v430
    %v432 = vpop.f32.mrf.mxu0
    %433 = vmatprep.mubr.f32.mxu0 0.0
    %434 = vmatmul.mubr.f32.gmra.mxu0 %v278
    %v435 = vpop.f32.mrf.mxu0
    %v436 = vadd.f32 %v302, %v435
    %v437 = vpop.f32.mrf.mxu0
    %438 = vmatprep.mubr.f32.mxu0 0.0
    %439 = vmatmul.mubr.f32.gmra.mxu0 %v279
    %v440 = vpop.f32.mrf.mxu0
    %v441 = vadd.f32 %v302, %v440
    %v442 = vpop.f32.mrf.mxu0
    %443 = vmatprep.mubr.f32.mxu0 0.0
    %444 = vmatmul.mubr.f32.gmra.mxu0 %v280
    %v445 = vpop.f32.mrf.mxu0
    %v446 = vadd.f32 %v302, %v445
    %v447 = vpop.f32.mrf.mxu0
    %448 = vdwg.mxu0
    %v449 = vmul.f32 %v371, 0.1
    %v450 = vmul.f32 %v376, 0.1
    %v451 = vmul.f32 %v381, 0.1
    %v452 = vmul.f32 %v386, 0.1
    %v453 = vmul.f32 %v391, 0.1
    %v454 = vmul.f32 %v396, 0.1
    %v455 = vmul.f32 %v401, 0.1
    %v456 = vmul.f32 %v406, 0.1
    %v457 = vmul.f32 %v411, 0.1
    %v458 = vmul.f32 %v416, 0.1
    %v459 = vmul.f32 %v421, 0.1
    %v460 = vmul.f32 %v426, 0.1
    %v461 = vmul.f32 %v431, 0.1
    %v462 = vmul.f32 %v436, 0.1
    %v463 = vmul.f32 %v441, 0.1
    %v464 = vmul.f32 %v446, 0.1
    %v465 = vmax.f32 %v371, %v449
    %v466 = vmax.f32 %v376, %v450
    %v467 = vmax.f32 %v381, %v451
    %v468 = vmax.f32 %v386, %v452
    %v469 = vmax.f32 %v391, %v453
    %v470 = vmax.f32 %v396, %v454
    %v471 = vmax.f32 %v401, %v455
    %v472 = vmax.f32 %v406, %v456
    %v473 = vmax.f32 %v411, %v457
    %v474 = vmax.f32 %v416, %v458
    %v475 = vmax.f32 %v421, %v459
    %v476 = vmax.f32 %v426, %v460
    %v477 = vmax.f32 %v431, %v461
    %v478 = vmax.f32 %v436, %v462
    %v479 = vmax.f32 %v441, %v463
    %v480 = vmax.f32 %v446, %v464
    %v481 = vld [vmem:[%s5] sm:$0x1]
    %s482 = sld [smem:[#allocation2]]
    %v483 = vstv %s482
    %484 = vmatprep.subr.mxu0 0.0
    %485 = vmatpush1.xpose.msra.mxu0 %v480
    %486 = vmatprep.subr.mxu0 0.0
    %487 = vmatpush1.xpose.msra.mxu0 %v479
    %488 = vmatprep.subr.mxu0 0.0
    %489 = vmatpush1.xpose.msra.mxu0 %v478
    %490 = vmatprep.subr.mxu0 0.0
    %491 = vmatpush1.xpose.msra.mxu0 %v477
    %492 = vmatprep.subr.mxu0 0.0
    %493 = vmatpush1.xpose.msra.mxu0 %v476
    %494 = vmatprep.subr.mxu0 0.0
    %495 = vmatpush1.xpose.msra.mxu0 %v475
    %496 = vmatprep.subr.mxu0 0.0
    %497 = vmatpush1.xpose.msra.mxu0 %v474
    %498 = vmatprep.subr.mxu0 0.0
    %499 = vmatpush1.xpose.msra.mxu0 %v473
    %500 = vmatprep.subr.mxu0 0.0
    %501 = vmatpush1.xpose.msra.mxu0 %v472
    %502 = vmatprep.subr.mxu0 0.0
    %503 = vmatpush1.xpose.msra.mxu0 %v471
    %504 = vmatprep.subr.mxu0 0.0
    %505 = vmatpush1.xpose.msra.mxu0 %v470
    %506 = vmatprep.subr.mxu0 0.0
    %507 = vmatpush1.xpose.msra.mxu0 %v469
    %508 = vmatprep.subr.mxu0 0.0
    %509 = vmatpush1.xpose.msra.mxu0 %v468
    %510 = vmatprep.subr.mxu0 0.0
    %511 = vmatpush1.xpose.msra.mxu0 %v467
    %512 = vmatprep.subr.mxu0 0.0
    %513 = vmatpush1.xpose.msra.mxu0 %v466
    %514 = vmatprep.subr.mxu0 0.0
    %515 = vmatpush1.xpose.msra.mxu0 %v465
    %516 = vmatprep.subr.mxu0 0.0
    %517 = vmatpush2.xpose.msra.mxu0 0.0
    %518 = vmatprep.subr.mxu0 0.0
    %519 = vmatpush2.xpose.msra.mxu0 0.0
    %520 = vmatprep.subr.mxu0 0.0
    %521 = vmatpush2.xpose.msra.mxu0 0.0
    %522 = vmatprep.subr.mxu0 0.0
    %523 = vmatpush2.xpose.msra.mxu0 0.0
    %524 = vmatprep.subr.mxu0 0.0
    %525 = vmatpush2.xpose.msra.mxu0 0.0
    %526 = vmatprep.subr.mxu0 0.0
    %527 = vmatpush2.xpose.msra.mxu0 0.0
    %528 = vmatprep.subr.mxu0 0.0
    %529 = vmatpush2.xpose.msra.mxu0 0.0
    %530 = vmatprep.subr.mxu0 0.0
    %531 = vmatpush2.xpose.msra.mxu0 0.0
    %532 = vmatprep.subr.mxu0 0.0
    %533 = vmatpush2.xpose.msra.mxu0 0.0
    %534 = vmatprep.subr.mxu0 0.0
    %535 = vmatpush2.xpose.msra.mxu0 0.0
    %536 = vmatprep.subr.mxu0 0.0
    %537 = vmatpush2.xpose.msra.mxu0 0.0
    %538 = vmatprep.subr.mxu0 0.0
    %539 = vmatpush2.xpose.msra.mxu0 0.0
    %540 = vmatprep.subr.mxu0 0.0
    %541 = vmatpush2.xpose.msra.mxu0 0.0
    %542 = vmatprep.subr.mxu0 0.0
    %543 = vmatpush2.xpose.msra.mxu0 0.0
    %544 = vmatprep.subr.mxu0 0.0
    %545 = vmatpush2.xpose.msra.mxu0 0.0
    %546 = vmatprep.subr.mxu0 0.0
    %547 = vmatpush2.xpose.msra.mxu0 0.0
    %548 = vmatprep.mubr.f32.mxu0 0.0
    %549 = vmatmul.mubr.f32.gmra.mxu0 %v481
    %v550 = vpop.f32.mrf.mxu0
    %v551 = vadd.f32 %v483, %v550
    %v552 = vpop.f32.mrf.mxu0
    %553 = vdwg.mxu0
    %v554 = vmul.f32 %v551, 0.5
    %v555 = vtanh.pop %v554
    %v556 = vadd.f32 %v555, 1.0
    %v557 = vmul.f32 %v556, 0.5
    %558 = vst [vmem:[#allocation3] sm:$0x1] %v557
    // Predicated region
    $region30: #{tpu_custom_call.1} parent=1 // pred_check
      _
    $region31: #{tpu_custom_call.1} parent=1 // pred_check_branch
      %560 = sbr.rel (0) target = $region33
    $region32: #{tpu_custom_call.1} parent=1 // pred_region
      %s562 = ssub.s32 16, 16
      %563 = vsyncadd [#allocation4], %s562
      %s565 = sshll.u32 [#allocation3], 4
      %s566 = int_to_ptr.vmem [resolvable:$true] %s565
      %568 = dma.vmem_to_hbm [thread:$0]  %s566, 16, %s7, [#allocation4]
    $region33: #{tpu_custom_call.1} parent=1 // pred_fallthru
      _
    // Predicated region
    $region34: #{tpu_custom_call.1} parent=1 // pred_check
      _
    $region35: #{tpu_custom_call.1} parent=1 // pred_check_branch
      %570 = sbr.rel (0) target = $region37
    $region36: #{tpu_custom_call.1} parent=1 // pred_region
      %571 = dma.done [#allocation4], 16
    $region37: #{tpu_custom_call.1} parent=1 // pred_fallthru
      _
    %572 = vsyncpa [#allocation4], 1

</llo_original>
